<compile_context>
chip_gen: v7x
topology: tpu7x:2x2x1
jax: 0.10.0
libtpu: 0.0.40
codegen_flags: <defaults>
</compile_context>

<pallas_src>
import functools

import jax
import jax.numpy as jnp
import numpy as np
from jax.experimental import pallas as pl
from jax.experimental.pallas import tpu as pltpu

PITCH_VOCAB_SIZE = 120
NUM_PARTS = 4
IN_FEAT = 9
HIDDEN_DIM = 4
OUT_DIM = PITCH_VOCAB_SIZE + NUM_PARTS      # 124
FLAT_IN = NUM_PARTS * IN_FEAT               # 36
COMB_DIM = NUM_PARTS * HIDDEN_DIM           # 16
OUT_PAD = 128                               # lane-dense padded output width


def harmony_kernel(x_ref, w1_ref, b1_ref, w2_ref, b2_ref, out_ref):
    """One batch-tile of the HarmonyModel forward.

    x_ref:  (tb, 36)    flattened input tile
    w1_ref: (36, 16)    block-diagonal, pre-transposed part weights
    b1_ref: (1, 16)     concatenated part biases
    w2_ref: (16, 128)   pre-transposed fc1 weight, zero-padded 124 -> 128
    b2_ref: (1, 128)    fc1 bias, zero-padded
    out_ref:(tb, 128)   lane-dense output tile (cols 124..127 are zero)
    """
    h = jnp.dot(x_ref[...], w1_ref[...], preferred_element_type=jnp.float32)
    h = jnp.maximum(h + b1_ref[...], 0.0)                       # ReLU (f32 VPU)
    out_ref[...] = (
        jnp.dot(h, w2_ref[...], preferred_element_type=jnp.float32) + b2_ref[...]
    )


def prepare_params(w_parts, b_parts, w_fc, b_fc):
    """One-time wrapper-side layout work: block-diag + transpose + lane padding."""
    w1 = jnp.zeros((FLAT_IN, COMB_DIM), jnp.float32)
    for i in range(NUM_PARTS):
        w1 = w1.at[i * IN_FEAT:(i + 1) * IN_FEAT,
                   i * HIDDEN_DIM:(i + 1) * HIDDEN_DIM].set(w_parts[i].T)
    b1 = b_parts.reshape(1, COMB_DIM).astype(jnp.float32)

    w2 = jnp.zeros((COMB_DIM, OUT_PAD), jnp.float32).at[:, :OUT_DIM].set(w_fc.T)
    b2 = jnp.zeros((1, OUT_PAD), jnp.float32).at[0, :OUT_DIM].set(b_fc)
    return w1, b1, w2, b2


@functools.partial(jax.jit, static_argnames=("tb",))
def _harmony_pallas(x2d, w1, b1, w2, b2, *, tb):
    Bp = x2d.shape[0]
    grid = (Bp // tb,)
    return pl.pallas_call(
        harmony_kernel,
        out_shape=jax.ShapeDtypeStruct((Bp, OUT_PAD), jnp.float32),
        grid_spec=pltpu.PrefetchScalarGridSpec(
            num_scalar_prefetch=0,
            grid=grid,
            in_specs=[
                pl.BlockSpec((tb, FLAT_IN), lambda i: (i, 0)),
                pl.BlockSpec((FLAT_IN, COMB_DIM), lambda i: (0, 0)),
                pl.BlockSpec((1, COMB_DIM), lambda i: (0, 0)),
                pl.BlockSpec((COMB_DIM, OUT_PAD), lambda i: (0, 0)),
                pl.BlockSpec((1, OUT_PAD), lambda i: (0, 0)),
            ],
            out_specs=pl.BlockSpec((tb, OUT_PAD), lambda i: (i, 0)),
        ),
        compiler_params=pltpu.CompilerParams(
            dimension_semantics=("parallel",),
            vmem_limit_bytes=64 << 20,
        ),
    )(x2d, w1, b1, w2, b2)


def _choose_tb(B, desired=2048):
    """Pick a batch tile: multiple of 8, large for bandwidth, but leave the grid
    with >= 2 steps when the batch allows it (v7x has 2 TensorCores)."""
    half = max(8, (B // 2) // 8 * 8)
    return max(8, min(desired, half))


def harmony_forward(x, w1, b1, w2, b2, *, tb=None):
    """x: (B, 4, 9) float -> (B, 124) float32."""
    B = x.shape[0]
    x2d = x.reshape(B, FLAT_IN).astype(jnp.float32)
    if tb is None:
        tb = _choose_tb(B)
    Bp = ((B + tb - 1) // tb) * tb
    if Bp != B:
        x2d = jnp.pad(x2d, ((0, Bp - B), (0, 0)))
    out = _harmony_pallas(x2d, w1, b1, w2, b2, tb=tb)
    return out[:B, :OUT_DIM]


def init_params(key):
    """Deterministic parameter init matching the PyTorch module's shapes.

    pt_i: Linear(9, H)    -> weight (H, 9)  [kaiming normal], bias (H,)  U(+-1/sqrt(9))
    fc1 : Linear(16, 124) -> weight (124, 16), bias (124,)    U(+-1/sqrt(16))
    """
    k = jax.random.split(key, 4)
    std_pt = float(np.sqrt(2.0 / IN_FEAT))
    w_parts = jax.random.normal(k[0], (NUM_PARTS, HIDDEN_DIM, IN_FEAT), jnp.float32) * std_pt
    bnd_pt = 1.0 / np.sqrt(IN_FEAT)
    b_parts = jax.random.uniform(k[1], (NUM_PARTS, HIDDEN_DIM), jnp.float32, -bnd_pt, bnd_pt)

    fan_in_fc = COMB_DIM
    bnd_fc = 1.0 / np.sqrt(fan_in_fc)
    w_fc = jax.random.uniform(k[2], (OUT_DIM, fan_in_fc), jnp.float32, -bnd_fc, bnd_fc)
    b_fc = jax.random.uniform(k[3], (OUT_DIM,), jnp.float32, -bnd_fc, bnd_fc)
    return w_parts, b_parts, w_fc, b_fc


def reference_forward(x, w_parts, b_parts, w_fc, b_fc):
    """Pure-JAX reference mirroring the PyTorch forward (full-precision dots)."""
    hi = jax.lax.Precision.HIGHEST
    pts = [jnp.dot(x[:, i, :], w_parts[i].T, precision=hi) + b_parts[i]
           for i in range(NUM_PARTS)]
    comb = jnp.maximum(jnp.concatenate(pts, axis=-1), 0.0)
    return jnp.dot(comb, w_fc.T, precision=hi) + b_fc


if __name__ == "__main__":
    key = jax.random.PRNGKey(0)
    kx, kp = jax.random.split(key)

    B = 16  # small test batch; tiled into 2 batch-tiles of 8
    x = jax.random.normal(kx, (B, NUM_PARTS, IN_FEAT), jnp.float32)
    w_parts, b_parts, w_fc, b_fc = init_params(kp)

    # One-time layout plumbing (block-diag + transpose + lane padding).
    w1, b1, w2, b2 = prepare_params(w_parts, b_parts, w_fc, b_fc)

    out = harmony_forward(x, w1, b1, w2, b2)
    out = jax.block_until_ready(out)

    ref = reference_forward(x, w_parts, b_parts, w_fc, b_fc)
    np.testing.assert_allclose(np.asarray(out), np.asarray(ref), rtol=1e-4, atol=1e-4)

    print("KERNEL_OK")
</pallas_src>

<mosaic_0001>
module attributes {stable_mosaic.version = 11 : i64} {
  func.func @harmony_kernel(%arg0: i32, %arg1: memref<8x36xf32, #tpu.memory_space<vmem>>, %arg2: memref<36x16xf32, #tpu.memory_space<vmem>>, %arg3: memref<1x16xf32, #tpu.memory_space<vmem>>, %arg4: memref<16x128xf32, #tpu.memory_space<vmem>>, %arg5: memref<1x128xf32, #tpu.memory_space<vmem>>, %arg6: memref<8x128xf32, #tpu.memory_space<vmem>>) attributes {dimension_semantics = [#tpu.dimension_semantics<parallel>], iteration_bounds = array<i64: 2>, scalar_prefetch = 0 : i64, scratch_operands = 0 : i64, tpu.core_type = #tpu.core_type<tc>, window_params = [{transform_indices = @transform_0, window_bounds = array<i64: 8, 36>}, {pipeline_mode = #tpu.pipeline_mode<synchronous>, transform_indices = @transform_1, window_bounds = array<i64: 36, 16>}, {pipeline_mode = #tpu.pipeline_mode<synchronous>, transform_indices = @transform_2, window_bounds = array<i64: 1, 16>}, {pipeline_mode = #tpu.pipeline_mode<synchronous>, transform_indices = @transform_3, window_bounds = array<i64: 16, 128>}, {pipeline_mode = #tpu.pipeline_mode<synchronous>, transform_indices = @transform_4, window_bounds = array<i64: 1, 128>}, {transform_indices = @transform_5, window_bounds = array<i64: 8, 128>}]} {
    %c0 = arith.constant 0 : index
    %c0_0 = arith.constant 0 : index
    %0 = vector.load %arg1[%c0, %c0_0] : memref<8x36xf32, #tpu.memory_space<vmem>>, vector<8x36xf32>
    %c0_1 = arith.constant 0 : index
    %c0_2 = arith.constant 0 : index
    %1 = vector.load %arg2[%c0_1, %c0_2] : memref<36x16xf32, #tpu.memory_space<vmem>>, vector<36x16xf32>
    %cst = arith.constant dense<0.000000e+00> : vector<8x16xf32>
    %2 = tpu.matmul %0, %1, %cst {dimension_numbers = #tpu.dot_dimension_numbers<[1], [0], [0], [1], [0, 0, 1, 1], [], []>} : vector<8x36xf32>, vector<36x16xf32>, vector<8x16xf32> -> vector<8x16xf32>
    %c0_3 = arith.constant 0 : index
    %c0_4 = arith.constant 0 : index
    %3 = vector.load %arg3[%c0_3, %c0_4] : memref<1x16xf32, #tpu.memory_space<vmem>>, vector<1x16xf32>
    %4 = vector.broadcast %3 : vector<1x16xf32> to vector<8x16xf32>
    %5 = arith.addf %2, %4 : vector<8x16xf32>
    %cst_5 = arith.constant 0.000000e+00 : f32
    %6 = vector.broadcast %cst_5 : f32 to vector<8x16xf32>
    %7 = arith.maximumf %5, %6 : vector<8x16xf32>
    %c0_6 = arith.constant 0 : index
    %c0_7 = arith.constant 0 : index
    %8 = vector.load %arg4[%c0_6, %c0_7] : memref<16x128xf32, #tpu.memory_space<vmem>>, vector<16x128xf32>
    %cst_8 = arith.constant dense<0.000000e+00> : vector<8x128xf32>
    %9 = tpu.matmul %7, %8, %cst_8 {dimension_numbers = #tpu.dot_dimension_numbers<[1], [0], [0], [1], [0, 0, 1, 1], [], []>} : vector<8x16xf32>, vector<16x128xf32>, vector<8x128xf32> -> vector<8x128xf32>
    %c0_9 = arith.constant 0 : index
    %c0_10 = arith.constant 0 : index
    %10 = vector.load %arg5[%c0_9, %c0_10] : memref<1x128xf32, #tpu.memory_space<vmem>>, vector<1x128xf32>
    %11 = vector.broadcast %10 : vector<1x128xf32> to vector<8x128xf32>
    %12 = arith.addf %9, %11 : vector<8x128xf32>
    %c0_11 = arith.constant 0 : index
    %c0_12 = arith.constant 0 : index
    %13 = vector.load %arg6[%c0_11, %c0_12] : memref<8x128xf32, #tpu.memory_space<vmem>>, vector<8x128xf32>
    tpu.vector_store %arg6[%c0_11, %c0_12], %12 {strides = array<i32>} : memref<8x128xf32, #tpu.memory_space<vmem>>, vector<8x128xf32>,
    return
  }
  func.func @transform_0(%arg0: i32) -> (i32, i32) {
    %c0_i32 = arith.constant 0 : i32
    %c0_i32_0 = arith.constant 0 : i32
    return %arg0, %c0_i32 : i32, i32
  }
  func.func @transform_1(%arg0: i32) -> (i32, i32) {
    %c0_i32 = arith.constant 0 : i32
    %c0_i32_0 = arith.constant 0 : i32
    %c0_i32_1 = arith.constant 0 : i32
    return %c0_i32, %c0_i32_0 : i32, i32
  }
  func.func @transform_2(%arg0: i32) -> (i32, i32) {
    %c0_i32 = arith.constant 0 : i32
    %c0_i32_0 = arith.constant 0 : i32
    %c0_i32_1 = arith.constant 0 : i32
    return %c0_i32, %c0_i32_0 : i32, i32
  }
  func.func @transform_3(%arg0: i32) -> (i32, i32) {
    %c0_i32 = arith.constant 0 : i32
    %c0_i32_0 = arith.constant 0 : i32
    %c0_i32_1 = arith.constant 0 : i32
    return %c0_i32, %c0_i32_0 : i32, i32
  }
  func.func @transform_4(%arg0: i32) -> (i32, i32) {
    %c0_i32 = arith.constant 0 : i32
    %c0_i32_0 = arith.constant 0 : i32
    %c0_i32_1 = arith.constant 0 : i32
    return %c0_i32, %c0_i32_0 : i32, i32
  }
  func.func @transform_5(%arg0: i32) -> (i32, i32) {
    %c0_i32 = arith.constant 0 : i32
    %c0_i32_0 = arith.constant 0 : i32
    return %arg0, %c0_i32 : i32, i32
  }
}

</mosaic_0001>

<llo_original>
// kernel: _harmony_pallas.1
$region0: #{_harmony_pallas.1}
  #allocation0 [shape = 'u32[]', space=smem, size = 0x4, offset = 0x4, fixed_abs, tag = 'smem constant byte address 0x4 - core index']
  #allocation1 [shape = 'u32[144,128]{1,0:T(1,128)}', space=vmem, size = 0x12000, scoped, tag = 'internal scratch']
  %s0 = inlined_call_operand.hbm [shape: f32[16,36], index: 0, kind: input, shape index: {}]
  %s1 = inlined_call_operand.hbm [shape: f32[36,16], index: 1, kind: input, shape index: {}]
  %s2 = inlined_call_operand.hbm [shape: f32[1,16], index: 2, kind: input, shape index: {}]
  %s3 = inlined_call_operand.hbm [shape: f32[16,128], index: 3, kind: input, shape index: {}]
  %s4 = inlined_call_operand.hbm [shape: f32[1,128], index: 4, kind: input, shape index: {}]
  %s5 = inlined_call_operand.hbm [shape: f32[16,128], index: 5, kind: output, shape index: {}]
  %s6 = sld [smem:[#allocation0]]
  $region73: #{_harmony_pallas.1} parent=0
    _
  %s8 = ssub.s32 1, %s6
  %s9 = scalar_select 0, %s8, %s6
  $region1: #{_harmony_pallas.1} parent=0
    #allocation2 [shape = 'u8[8192]{0}', space=vmem, size = 0x2000, scoped, tag = 'input window, operand 0']
    #allocation3 [shape = 's32[2]{0}', space=sflag, size = 0x8, scoped, tag = 'scoped memory for _harmony_pallas.1']
    #allocation4 [shape = 's32[2]{0}', space=sflag, size = 0x8, scoped, tag = 'scoped memory for _harmony_pallas.1']
    #allocation5 [shape = 'u8[20480]{0}', space=vmem, size = 0x5000, scoped, tag = 'input window, operand 1, single buffered']
    #allocation6 [shape = 's32[1]{0}', space=sflag, size = 0x4, scoped, tag = 'scoped memory for _harmony_pallas.1']
    #allocation7 [shape = 'u8[512]{0}', space=vmem, size = 0x400, scoped, tag = 'input window, operand 2, single buffered']
    #allocation8 [shape = 'u8[8192]{0}', space=vmem, size = 0x2000, scoped, tag = 'input window, operand 3, single buffered']
    #allocation9 [shape = 's32[1]{0}', space=sflag, size = 0x4, scoped, tag = 'scoped memory for _harmony_pallas.1']
    #allocation10 [shape = 'u8[512]{0}', space=vmem, size = 0x400, scoped, tag = 'input window, operand 4, single buffered']
    #allocation11 [shape = 'u8[8192]{0}', space=vmem, size = 0x2000, scoped, tag = 'output window, operand 0']
    %10 = vsyncpa [#allocation3], 0
    %s11 = scalar_lea.sflag [#allocation3], 1
    %12 = vsyncpa %s11, 0
    %13 = vsyncpa [#allocation6], 0
    %14 = vsyncpa [#allocation9], 0
    %15 = vsyncpa [#allocation4], 0
    %s16 = scalar_lea.sflag [#allocation4], 1
    %17 = vsyncpa %s16, 0
    loop: start=0, step=1, limit=4
    $region2: #{_harmony_pallas.1} parent=1 // loop_pre_header
      _
    $region3: #{_harmony_pallas.1} parent=1 // loop_header
      %s19 = sphi 0, %s23
      %p20 = scmp.ge.s32.totalorder %s19, 4
      %s29 = sphi 0, %s31
      %s32 = sphi 0, %s29
      %s33 = sphi 0, %s32
      %s49 = sphi 0, %s33
      %s53 = sphi 0, %s53
      %s55 = sphi 0, %s53
      %s56 = sphi 0, %s55
      %s70 = sphi 0, %s56
      %s74 = sphi 0, %s74
      %s76 = sphi 0, %s74
      %s77 = sphi 0, %s76
      %s91 = sphi 0, %s77
      %s95 = sphi 0, %s95
      %s97 = sphi 0, %s95
      %s98 = sphi 0, %s97
      %s112 = sphi 0, %s98
      %s116 = sphi 0, %s116
      %s118 = sphi 0, %s116
      %s119 = sphi 0, %s118
      %s133 = sphi 0, %s119
      %s139 = sphi 0, %s141
      %s142 = sphi 0, %s139
      %s143 = sphi 0, %s142
      %s159 = sphi 0, %s143
    $region4: #{_harmony_pallas.1} parent=1 // loop_header_branch
      %22 = sbr.rel (%p20) target = $region8
    $region5: #{_harmony_pallas.1} parent=1 // loop_body
      %s24 = ssub.s32 %s19, 1
      %s25 = ssub.s32 %s19, 2
      %s26 = sadd.s32 %s19, 1
      %s27 = ssub.s32 %s19, %s26
      %p28 = scmp.eq.s32.totalorder %s27, 0
      %s30 = sadd.s32 %s29, 1
      %s31 = scalar_select %p28, %s29, %s30
      %p34 = pneg %p28
      %p35 = scmp.eq.s32.totalorder %s19, 1
      %p36 = por %p34, %p35
      %p37 = scmp.ne.s32.totalorder %s29, %s32
      %p38 = scmp.eq.s32.totalorder %s19, 0
      %p39 = por %p37, %p38
      %p40 = scmp.ne.s32.totalorder %s29, %s32
      %p41 = scmp.eq.s32.totalorder %s24, 1
      %p42 = por %p40, %p41
      %p43 = scmp.ne.s32.totalorder %s32, %s33
      %p44 = scmp.eq.s32.totalorder %s24, 0
      %p45 = por %p43, %p44
      %p46 = scmp.ne.s32.totalorder %s32, %s33
      %p47 = scmp.eq.s32.totalorder %s25, 1
      %p48 = por %p46, %p47
      %p50 = scmp.ne.s32.totalorder %s33, %s49
      %p51 = scmp.eq.s32.totalorder %s25, 0
      %p52 = por %p50, %p51
      %s54 = sadd.s32 %s53, 1
      %p57 = scmp.eq.s32.totalorder %s19, 1
      %p58 = scmp.ne.s32.totalorder %s53, %s55
      %p59 = scmp.eq.s32.totalorder %s19, 0
      %p60 = por %p58, %p59
      %p61 = scmp.ne.s32.totalorder %s53, %s55
      %p62 = scmp.eq.s32.totalorder %s24, 1
      %p63 = por %p61, %p62
      %p64 = scmp.ne.s32.totalorder %s55, %s56
      %p65 = scmp.eq.s32.totalorder %s24, 0
      %p66 = por %p64, %p65
      %p67 = scmp.ne.s32.totalorder %s55, %s56
      %p68 = scmp.eq.s32.totalorder %s25, 1
      %p69 = por %p67, %p68
      %p71 = scmp.ne.s32.totalorder %s56, %s70
      %p72 = scmp.eq.s32.totalorder %s25, 0
      %p73 = por %p71, %p72
      %s75 = sadd.s32 %s74, 1
      %p78 = scmp.eq.s32.totalorder %s19, 1
      %p79 = scmp.ne.s32.totalorder %s74, %s76
      %p80 = scmp.eq.s32.totalorder %s19, 0
      %p81 = por %p79, %p80
      %p82 = scmp.ne.s32.totalorder %s74, %s76
      %p83 = scmp.eq.s32.totalorder %s24, 1
      %p84 = por %p82, %p83
      %p85 = scmp.ne.s32.totalorder %s76, %s77
      %p86 = scmp.eq.s32.totalorder %s24, 0
      %p87 = por %p85, %p86
      %p88 = scmp.ne.s32.totalorder %s76, %s77
      %p89 = scmp.eq.s32.totalorder %s25, 1
      %p90 = por %p88, %p89
      %p92 = scmp.ne.s32.totalorder %s77, %s91
      %p93 = scmp.eq.s32.totalorder %s25, 0
      %p94 = por %p92, %p93
      %s96 = sadd.s32 %s95, 1
      %p99 = scmp.eq.s32.totalorder %s19, 1
      %p100 = scmp.ne.s32.totalorder %s95, %s97
      %p101 = scmp.eq.s32.totalorder %s19, 0
      %p102 = por %p100, %p101
      %p103 = scmp.ne.s32.totalorder %s95, %s97
      %p104 = scmp.eq.s32.totalorder %s24, 1
      %p105 = por %p103, %p104
      %p106 = scmp.ne.s32.totalorder %s97, %s98
      %p107 = scmp.eq.s32.totalorder %s24, 0
      %p108 = por %p106, %p107
      %p109 = scmp.ne.s32.totalorder %s97, %s98
      %p110 = scmp.eq.s32.totalorder %s25, 1
      %p111 = por %p109, %p110
      %p113 = scmp.ne.s32.totalorder %s98, %s112
      %p114 = scmp.eq.s32.totalorder %s25, 0
      %p115 = por %p113, %p114
      %s117 = sadd.s32 %s116, 1
      %p120 = scmp.eq.s32.totalorder %s19, 1
      %p121 = scmp.ne.s32.totalorder %s116, %s118
      %p122 = scmp.eq.s32.totalorder %s19, 0
      %p123 = por %p121, %p122
      %p124 = scmp.ne.s32.totalorder %s116, %s118
      %p125 = scmp.eq.s32.totalorder %s24, 1
      %p126 = por %p124, %p125
      %p127 = scmp.ne.s32.totalorder %s118, %s119
      %p128 = scmp.eq.s32.totalorder %s24, 0
      %p129 = por %p127, %p128
      %p130 = scmp.ne.s32.totalorder %s118, %s119
      %p131 = scmp.eq.s32.totalorder %s25, 1
      %p132 = por %p130, %p131
      %p134 = scmp.ne.s32.totalorder %s119, %s133
      %p135 = scmp.eq.s32.totalorder %s25, 0
      %p136 = por %p134, %p135
      %s137 = ssub.s32 %s19, %s26
      %p138 = scmp.eq.s32.totalorder %s137, 0
      %s140 = sadd.s32 %s139, 1
      %s141 = scalar_select %p138, %s139, %s140
      %p144 = pneg %p138
      %p145 = scmp.eq.s32.totalorder %s19, 1
      %p146 = por %p144, %p145
      %p147 = scmp.ne.s32.totalorder %s139, %s142
      %p148 = scmp.eq.s32.totalorder %s19, 0
      %p149 = por %p147, %p148
      %p150 = scmp.ne.s32.totalorder %s139, %s142
      %p151 = scmp.eq.s32.totalorder %s24, 1
      %p152 = por %p150, %p151
      %p153 = scmp.ne.s32.totalorder %s142, %s143
      %p154 = scmp.eq.s32.totalorder %s24, 0
      %p155 = por %p153, %p154
      %p156 = scmp.ne.s32.totalorder %s142, %s143
      %p157 = scmp.eq.s32.totalorder %s25, 1
      %p158 = por %p156, %p157
      %p160 = scmp.ne.s32.totalorder %s143, %s159
      %p161 = scmp.eq.s32.totalorder %s25, 0
      %p162 = por %p160, %p161
      %p163 = scmp.le.s32.totalorder 1, %s19
      %p164 = scmp.lt.s32.totalorder %s19, 3
      %p165 = pnand %p163, %p164
      %p166 = pneg %p165
      // Predicated region
      $region9: #{_harmony_pallas.1} parent=5 // pred_check
        _
      $region10: #{_harmony_pallas.1} parent=5 // pred_check_branch
        %168 = sbr.rel (%p165) target = $region12
      $region11: #{_harmony_pallas.1} parent=5 // pred_region
        %s169 = ssub.s32 %s19, 1
        // Predicated region
        $region13: #{_harmony_pallas.1} parent=11 // pred_check
          %p170 = pneg %p66
        $region14: #{_harmony_pallas.1} parent=11 // pred_check_branch
          %172 = sbr.rel (%p170) target = $region16
        $region15: #{_harmony_pallas.1} parent=11 // pred_region
          %s174 = ssub.s32 640, 640
          %175 = vsyncadd [#allocation6], %s174
          %s176 = sshll.u32 [#allocation5], 4
          %s177 = int_to_ptr.vmem [resolvable:$true] %s176
          %182 = dma.hbm_to_vmem [thread:$0]  %s1, 640, %s177, [#allocation6], 128, 128, 8
        $region16: #{_harmony_pallas.1} parent=11 // pred_fallthru
          _
        // Predicated region
        $region17: #{_harmony_pallas.1} parent=11 // pred_check
          %p183 = pneg %p87
        $region18: #{_harmony_pallas.1} parent=11 // pred_check_branch
          %185 = sbr.rel (%p183) target = $region20
        $region19: #{_harmony_pallas.1} parent=11 // pred_region
          %s187 = ssub.s32 16, 16
          %188 = vsyncadd [#allocation6], %s187
          %s190 = sshll.u32 [#allocation7], 4
          %s191 = int_to_ptr.vmem [resolvable:$true] %s190
          %193 = dma.hbm_to_vmem [thread:$0]  %s2, 16, %s191, [#allocation6]
        $region20: #{_harmony_pallas.1} parent=11 // pred_fallthru
          _
        // Predicated region
        $region21: #{_harmony_pallas.1} parent=11 // pred_check
          %p194 = pneg %p108
        $region22: #{_harmony_pallas.1} parent=11 // pred_check_branch
          %196 = sbr.rel (%p194) target = $region24
        $region23: #{_harmony_pallas.1} parent=11 // pred_region
          %s198 = ssub.s32 256, 256
          %199 = vsyncadd [#allocation9], %s198
          %s200 = sshll.u32 [#allocation8], 4
          %s201 = int_to_ptr.vmem [resolvable:$true] %s200
          %206 = dma.hbm_to_vmem [thread:$0]  %s3, 256, %s201, [#allocation9], 128, 128, 8
        $region24: #{_harmony_pallas.1} parent=11 // pred_fallthru
          _
        // Predicated region
        $region25: #{_harmony_pallas.1} parent=11 // pred_check
          %p207 = pneg %p129
        $region26: #{_harmony_pallas.1} parent=11 // pred_check_branch
          %209 = sbr.rel (%p207) target = $region28
        $region27: #{_harmony_pallas.1} parent=11 // pred_region
          %s211 = ssub.s32 16, 16
          %212 = vsyncadd [#allocation9], %s211
          %s214 = sshll.u32 [#allocation10], 4
          %s215 = int_to_ptr.vmem [resolvable:$true] %s214
          %217 = dma.hbm_to_vmem [thread:$0]  %s4, 16, %s215, [#allocation9]
        $region28: #{_harmony_pallas.1} parent=11 // pred_fallthru
          _
      $region12: #{_harmony_pallas.1} parent=5 // pred_fallthru
        _
      %p218 = scmp.lt.s32.totalorder %s19, 2
      // Predicated region
      $region29: #{_harmony_pallas.1} parent=5 // pred_check
        %p219 = pneg %p218
      $region30: #{_harmony_pallas.1} parent=5 // pred_check_branch
        %221 = sbr.rel (%p219) target = $region32
      $region31: #{_harmony_pallas.1} parent=5 // pred_region
        // Predicated region
        $region33: #{_harmony_pallas.1} parent=31 // pred_check
          %p222 = pneg %p39
        $region34: #{_harmony_pallas.1} parent=31 // pred_check_branch
          %224 = sbr.rel (%p222) target = $region36
        $region35: #{_harmony_pallas.1} parent=31 // pred_region
          %s225 = sand.u32 %s29, 1
          %s226 = scalar_lea.sflag [#allocation3], %s225
          %s227 = sand.u32 %s29, 1
          %s228 = smul.addr %s227, 8
          %s229 = scalar_lea.vmem [#allocation2], %s228
          %s231 = ssub.s32 128, 128
          %232 = vsyncadd %s226, %s231
          %s233 = smul.addr %s19, 128
          %s234 = scalar_lea.hbm %s0, %s233
          %s236 = sshll.u32 %s229, 4
          %s237 = int_to_ptr.vmem [resolvable:$true] %s236
          %239 = dma.hbm_to_vmem [thread:$0]  %s234, 128, %s237, %s226
        $region36: #{_harmony_pallas.1} parent=31 // pred_fallthru
          _
      $region32: #{_harmony_pallas.1} parent=5 // pred_fallthru
        _
      %p240 = scmp.le.s32.totalorder 1, %s19
      %p241 = scmp.lt.s32.totalorder %s19, 3
      %p242 = pnand %p240, %p241
      %p243 = pneg %p242
      // Predicated region
      $region37: #{_harmony_pallas.1} parent=5 // pred_check
        _
      $region38: #{_harmony_pallas.1} parent=5 // pred_check_branch
        %245 = sbr.rel (%p242) target = $region40
      $region39: #{_harmony_pallas.1} parent=5 // pred_region
        %s246 = ssub.s32 %s19, 1
        %s247 = sand.u32 %s32, 1
        %s248 = scalar_lea.sflag [#allocation3], %s247
        %s249 = sand.u32 %s32, 1
        %s250 = smul.addr %s249, 8
        %s251 = scalar_lea.vmem [#allocation2], %s250
        // Predicated region
        $region41: #{_harmony_pallas.1} parent=39 // pred_check
          %p252 = pneg %p45
        $region42: #{_harmony_pallas.1} parent=39 // pred_check_branch
          %254 = sbr.rel (%p252) target = $region44
        $region43: #{_harmony_pallas.1} parent=39 // pred_region
          %255 = dma.done %s248, 128
        $region44: #{_harmony_pallas.1} parent=39 // pred_fallthru
          _
        // Predicated region
        $region45: #{_harmony_pallas.1} parent=39 // pred_check
          %p256 = pneg %p66
        $region46: #{_harmony_pallas.1} parent=39 // pred_check_branch
          %258 = sbr.rel (%p256) target = $region48
        $region47: #{_harmony_pallas.1} parent=39 // pred_region
          %259 = dma.done [#allocation6], 640
        $region48: #{_harmony_pallas.1} parent=39 // pred_fallthru
          _
        // Predicated region
        $region49: #{_harmony_pallas.1} parent=39 // pred_check
          %p260 = pneg %p87
        $region50: #{_harmony_pallas.1} parent=39 // pred_check_branch
          %262 = sbr.rel (%p260) target = $region52
        $region51: #{_harmony_pallas.1} parent=39 // pred_region
          %263 = dma.done [#allocation6], 16
        $region52: #{_harmony_pallas.1} parent=39 // pred_fallthru
          _
        // Predicated region
        $region53: #{_harmony_pallas.1} parent=39 // pred_check
          %p264 = pneg %p108
        $region54: #{_harmony_pallas.1} parent=39 // pred_check_branch
          %266 = sbr.rel (%p264) target = $region56
        $region55: #{_harmony_pallas.1} parent=39 // pred_region
          %267 = dma.done [#allocation9], 256
        $region56: #{_harmony_pallas.1} parent=39 // pred_fallthru
          _
        // Predicated region
        $region57: #{_harmony_pallas.1} parent=39 // pred_check
          %p268 = pneg %p129
        $region58: #{_harmony_pallas.1} parent=39 // pred_check_branch
          %270 = sbr.rel (%p268) target = $region60
        $region59: #{_harmony_pallas.1} parent=39 // pred_region
          %271 = dma.done [#allocation9], 16
        $region60: #{_harmony_pallas.1} parent=39 // pred_fallthru
          _
        %s272 = sand.u32 %s32, 1
        %s273 = scalar_lea.sflag [#allocation3], %s272
        %s274 = sand.u32 %s32, 1
        %s275 = smul.addr %s274, 8
        %s276 = scalar_lea.vmem [#allocation2], %s275
        %p277 = pneg %p45
        %p278 = pneg %p42
        %p279 = pneg %p66
        %p280 = pneg %p63
        %p281 = pneg %p87
        %p282 = pneg %p84
        %p283 = pneg %p108
        %p284 = pneg %p105
        %p285 = pneg %p129
        %p286 = pneg %p126
        %p287 = pneg %p155
        %p288 = pneg %p152
        %s289 = sand.u32 %s142, 1
        %s290 = scalar_lea.sflag [#allocation4], %s289
        %s291 = sand.u32 %s142, 1
        %s292 = smul.addr %s291, 8
        %s293 = scalar_lea.vmem [#allocation11], %s292
        %v294 = vld [vmem:[%s251] sm:$0xff]
        %v295 = vld [vmem:[#allocation5] sm:$0xff]
        %v296 = vld [vmem:[#allocation5 + $0x8] sm:$0xff]
        %v297 = vld [vmem:[#allocation5 + $0x10] sm:$0xff]
        %v298 = vld [vmem:[#allocation5 + $0x18] sm:$0xff]
        %v299 = vld [vmem:[#allocation5 + $0x20] sm:$0xf]
        %v300 = vld [vmem:[#allocation7] sm:$0x1]
        %v302 = vlaneseq
        %v303 = vshrl.u32 %v302, 7
        %v304 = vsub.s32 0, %v303
        %v305 = vrot.slane %v300, %v304
        %vm307 = vcmask 293888
        %v309 = vsel %vm307, %v294, 0
        %vm311 = vcmask 1043456
        %v313 = vsel %vm311, %v299, 0
        %315 = vmatprep.subr.mxu0 0.0
        %316 = vmatpush1.msra.mxu0 %v295
        %317 = vmatprep.subr.mxu0 0.0
        %318 = vmatpush1.msra.mxu0 %v296
        %319 = vmatprep.subr.mxu0 0.0
        %320 = vmatpush1.msra.mxu0 %v297
        %321 = vmatprep.subr.mxu0 0.0
        %322 = vmatpush1.msra.mxu0 %v298
        %323 = vmatprep.subr.mxu0 0.0
        %324 = vmatpush1.msra.mxu0 %v313
        %325 = vmatprep.subr.mxu0 0.0
        %326 = vmatpush1.msra.mxu0 0.0
        %327 = vmatprep.subr.mxu0 0.0
        %328 = vmatpush1.msra.mxu0 0.0
        %329 = vmatprep.subr.mxu0 0.0
        %330 = vmatpush1.msra.mxu0 0.0
        %331 = vmatprep.subr.mxu0 0.0
        %332 = vmatpush1.msra.mxu0 0.0
        %333 = vmatprep.subr.mxu0 0.0
        %334 = vmatpush1.msra.mxu0 0.0
        %335 = vmatprep.subr.mxu0 0.0
        %336 = vmatpush1.msra.mxu0 0.0
        %337 = vmatprep.subr.mxu0 0.0
        %338 = vmatpush1.msra.mxu0 0.0
        %339 = vmatprep.subr.mxu0 0.0
        %340 = vmatpush1.msra.mxu0 0.0
        %341 = vmatprep.subr.mxu0 0.0
        %342 = vmatpush1.msra.mxu0 0.0
        %343 = vmatprep.subr.mxu0 0.0
        %344 = vmatpush1.msra.mxu0 0.0
        %345 = vmatprep.subr.mxu0 0.0
        %346 = vmatpush1.msra.mxu0 0.0
        %347 = vmatprep.subr.mxu0 0.0
        %348 = vmatpush1.msra.mxu0 0.0
        %349 = vmatprep.subr.mxu0 0.0
        %350 = vmatpush1.msra.mxu0 0.0
        %351 = vmatprep.subr.mxu0 0.0
        %352 = vmatpush1.msra.mxu0 0.0
        %353 = vmatprep.subr.mxu0 0.0
        %354 = vmatpush1.msra.mxu0 0.0
        %355 = vmatprep.subr.mxu0 0.0
        %356 = vmatpush1.msra.mxu0 0.0
        %357 = vmatprep.subr.mxu0 0.0
        %358 = vmatpush1.msra.mxu0 0.0
        %359 = vmatprep.subr.mxu0 0.0
        %360 = vmatpush1.msra.mxu0 0.0
        %361 = vmatprep.subr.mxu0 0.0
        %362 = vmatpush1.msra.mxu0 0.0
        %363 = vmatprep.subr.mxu0 0.0
        %364 = vmatpush1.msra.mxu0 0.0
        %365 = vmatprep.subr.mxu0 0.0
        %366 = vmatpush1.msra.mxu0 0.0
        %367 = vmatprep.subr.mxu0 0.0
        %368 = vmatpush1.msra.mxu0 0.0
        %369 = vmatprep.subr.mxu0 0.0
        %370 = vmatpush1.msra.mxu0 0.0
        %371 = vmatprep.subr.mxu0 0.0
        %372 = vmatpush1.msra.mxu0 0.0
        %373 = vmatprep.subr.mxu0 0.0
        %374 = vmatpush1.msra.mxu0 0.0
        %375 = vmatprep.subr.mxu0 0.0
        %376 = vmatpush1.msra.mxu0 0.0
        %377 = vmatprep.subr.mxu0 0.0
        %378 = vmatpush1.msra.mxu0 0.0
        %379 = vmatprep.mubr.f32.mxu0 0.0
        %380 = vmatmul.mubr.f32.gmra.mrb[0].mxu0 %v309
        %v381 = vpop.f32.mrb[0].mxu0
        %v382 = vadd.f32 %v305, %v381
        %v383 = vpop.f32.mrb[0].mxu0
        %384 = vdwg.mxu0
        %v385 = vmax.f32 %v382, 0.0
        %v386 = vld [vmem:[#allocation8] sm:$0xff]
        %v387 = vld [vmem:[#allocation8 + $0x8] sm:$0xff]
        %v388 = vld [vmem:[#allocation10] sm:$0x1]
        %v390 = vlaneseq
        %v391 = vshrl.u32 %v390, 7
        %v392 = vsub.s32 0, %v391
        %v393 = vrot.slane %v388, %v392
        %vm395 = vcmask 130048
        %v397 = vsel %vm395, %v385, 0
        %399 = vmatprep.subr.mxu0 0.0
        %400 = vmatpush1.msra.mxu0 %v386
        %401 = vmatprep.subr.mxu0 0.0
        %402 = vmatpush1.msra.mxu0 %v387
        %403 = vmatprep.subr.mxu0 0.0
        %404 = vmatpush1.msra.mxu0 0.0
        %405 = vmatprep.subr.mxu0 0.0
        %406 = vmatpush1.msra.mxu0 0.0
        %407 = vmatprep.subr.mxu0 0.0
        %408 = vmatpush1.msra.mxu0 0.0
        %409 = vmatprep.subr.mxu0 0.0
        %410 = vmatpush1.msra.mxu0 0.0
        %411 = vmatprep.subr.mxu0 0.0
        %412 = vmatpush1.msra.mxu0 0.0
        %413 = vmatprep.subr.mxu0 0.0
        %414 = vmatpush1.msra.mxu0 0.0
        %415 = vmatprep.subr.mxu0 0.0
        %416 = vmatpush1.msra.mxu0 0.0
        %417 = vmatprep.subr.mxu0 0.0
        %418 = vmatpush1.msra.mxu0 0.0
        %419 = vmatprep.subr.mxu0 0.0
        %420 = vmatpush1.msra.mxu0 0.0
        %421 = vmatprep.subr.mxu0 0.0
        %422 = vmatpush1.msra.mxu0 0.0
        %423 = vmatprep.subr.mxu0 0.0
        %424 = vmatpush1.msra.mxu0 0.0
        %425 = vmatprep.subr.mxu0 0.0
        %426 = vmatpush1.msra.mxu0 0.0
        %427 = vmatprep.subr.mxu0 0.0
        %428 = vmatpush1.msra.mxu0 0.0
        %429 = vmatprep.subr.mxu0 0.0
        %430 = vmatpush1.msra.mxu0 0.0
        %431 = vmatprep.subr.mxu0 0.0
        %432 = vmatpush1.msra.mxu0 0.0
        %433 = vmatprep.subr.mxu0 0.0
        %434 = vmatpush1.msra.mxu0 0.0
        %435 = vmatprep.subr.mxu0 0.0
        %436 = vmatpush1.msra.mxu0 0.0
        %437 = vmatprep.subr.mxu0 0.0
        %438 = vmatpush1.msra.mxu0 0.0
        %439 = vmatprep.subr.mxu0 0.0
        %440 = vmatpush1.msra.mxu0 0.0
        %441 = vmatprep.subr.mxu0 0.0
        %442 = vmatpush1.msra.mxu0 0.0
        %443 = vmatprep.subr.mxu0 0.0
        %444 = vmatpush1.msra.mxu0 0.0
        %445 = vmatprep.subr.mxu0 0.0
        %446 = vmatpush1.msra.mxu0 0.0
        %447 = vmatprep.subr.mxu0 0.0
        %448 = vmatpush1.msra.mxu0 0.0
        %449 = vmatprep.subr.mxu0 0.0
        %450 = vmatpush1.msra.mxu0 0.0
        %451 = vmatprep.subr.mxu0 0.0
        %452 = vmatpush1.msra.mxu0 0.0
        %453 = vmatprep.subr.mxu0 0.0
        %454 = vmatpush1.msra.mxu0 0.0
        %455 = vmatprep.subr.mxu0 0.0
        %456 = vmatpush1.msra.mxu0 0.0
        %457 = vmatprep.subr.mxu0 0.0
        %458 = vmatpush1.msra.mxu0 0.0
        %459 = vmatprep.subr.mxu0 0.0
        %460 = vmatpush1.msra.mxu0 0.0
        %461 = vmatprep.subr.mxu0 0.0
        %462 = vmatpush1.msra.mxu0 0.0
        %463 = vmatprep.mubr.f32.mxu0 0.0
        %464 = vmatmul.mubr.f32.gmra.mrb[0].mxu0 %v397
        %v465 = vpop.f32.mrb[0].mxu0
        %v466 = vadd.f32 %v393, %v465
        %v467 = vpop.f32.mrb[0].mxu0
        %468 = vdwg.mxu0
        %469 = vst [vmem:[%s293] sm:$0xff] %v466
        %s470 = sand.u32 %s142, 1
        %s471 = scalar_lea.sflag [#allocation4], %s470
        %s472 = sand.u32 %s142, 1
        %s473 = smul.addr %s472, 8
        %s474 = scalar_lea.vmem [#allocation11], %s473
        // Predicated region
        $region61: #{_harmony_pallas.1} parent=39 // pred_check
          %p475 = pneg %p152
        $region62: #{_harmony_pallas.1} parent=39 // pred_check_branch
          %477 = sbr.rel (%p475) target = $region64
        $region63: #{_harmony_pallas.1} parent=39 // pred_region
          %s479 = ssub.s32 128, 128
          %480 = vsyncadd %s471, %s479
          %s481 = smul.addr %s24, 128
          %s482 = scalar_lea.hbm %s5, %s481
          %s484 = sshll.u32 %s474, 4
          %s485 = int_to_ptr.vmem [resolvable:$true] %s484
          %487 = dma.vmem_to_hbm [thread:$0]  %s485, 128, %s482, %s471
        $region64: #{_harmony_pallas.1} parent=39 // pred_fallthru
          _
      $region40: #{_harmony_pallas.1} parent=5 // pred_fallthru
        _
      %p488 = scmp.le.s32.totalorder 2, %s19
      // Predicated region
      $region65: #{_harmony_pallas.1} parent=5 // pred_check
        %p489 = pneg %p488
      $region66: #{_harmony_pallas.1} parent=5 // pred_check_branch
        %491 = sbr.rel (%p489) target = $region68
      $region67: #{_harmony_pallas.1} parent=5 // pred_region
        %s492 = ssub.s32 %s19, 2
        // Predicated region
        $region69: #{_harmony_pallas.1} parent=67 // pred_check
          %p493 = pneg %p158
        $region70: #{_harmony_pallas.1} parent=67 // pred_check_branch
          %495 = sbr.rel (%p493) target = $region72
        $region71: #{_harmony_pallas.1} parent=67 // pred_region
          %s496 = sand.u32 %s143, 1
          %s497 = scalar_lea.sflag [#allocation4], %s496
          %s498 = sand.u32 %s143, 1
          %s499 = smul.addr %s498, 8
          %s500 = scalar_lea.vmem [#allocation11], %s499
          %501 = dma.done %s497, 128
        $region72: #{_harmony_pallas.1} parent=67 // pred_fallthru
          _
      $region68: #{_harmony_pallas.1} parent=5 // pred_fallthru
        _
    $region6: #{_harmony_pallas.1} parent=1 // loop_footer
      %s23 = sadd.s32 1, %s19
    $region7: #{_harmony_pallas.1} parent=1 // loop_footer_branch
      %18 = sbr.rel target = $region3
    $region8: #{_harmony_pallas.1} parent=1 // loop_exit
      _
    %502 = vsyncpa [#allocation3], 1
    %s503 = scalar_lea.sflag [#allocation3], 1
    %504 = vsyncpa %s503, 1
    %505 = vsyncpa [#allocation6], 1
    %506 = vsyncpa [#allocation9], 1
    %507 = vsyncpa [#allocation4], 1
    %s508 = scalar_lea.sflag [#allocation4], 1
    %509 = vsyncpa %s508, 1

</llo_original>
